<compile_context>
chip_gen: v7x
topology: tpu7x:2x2x1
jax: 0.10.0
libtpu: 0.0.40
codegen_flags: <defaults>
</compile_context>

<pallas_src>
import math

import jax
import jax.numpy as jnp
from jax import lax
from jax.experimental import pallas as pl
from jax.experimental.pallas import tpu as pltpu

_LOG2PI = math.log(2.0 * math.pi)


def _fused_actor_critic_kernel(
    x_ref, act_ref, inv_var_ref,
    w1_ref, b1_ref, w2_ref, b2_ref, w3_ref, b3_ref,
    out_ref,
):
    """One batch tile of the fused (actor || critic) MLP + diag-MVN log_prob.

    Output slab layout (lane-dense, 128 wide):
      cols [0, A)  : action mean
      col  A       : state value
      col  A + 1   : log_prob(action)
      cols > A + 1 : junk (constant bias); ignored by the wrapper
    """
    x = x_ref[...]                                            # (TB, S)

    # Fused layers 1 & 2: actor occupies lanes [0:64), critic lanes [64:128).
    h = jnp.tanh(jnp.dot(x, w1_ref[...],
                         preferred_element_type=jnp.float32) + b1_ref[...])
    h = jnp.tanh(jnp.dot(h, w2_ref[...],
                         preferred_element_type=jnp.float32) + b2_ref[...])
    # Fused layer 3 -> (TB, 128) lane-dense slab:
    #   mean in cols [0:A], value at col A, -0.5*(logdet + A*log2pi) at col A+1
    #   (constant folded into b3, that w3 column is all zeros).
    y = jnp.dot(h, w3_ref[...],
                preferred_element_type=jnp.float32) + b3_ref[...]

    A = act_ref.shape[-1]
    mean = y[:, :A]                                           # (TB, A)
    diff = act_ref[...] - mean
    # inv_var precomputed on host -> multiply, no divide.
    maha = jnp.sum(diff * diff * inv_var_ref[...], axis=-1, keepdims=True)
    logprob = y[:, A + 1:A + 2] - 0.5 * maha                  # (TB, 1)

    col = lax.broadcasted_iota(jnp.int32, y.shape, 1)
    out_ref[...] = jnp.where(col == A + 1,
                             jnp.broadcast_to(logprob, y.shape), y)


def actor_critic_evaluate(state, action, action_var, params, *, block_b=512):
    """Pallas implementation of ActorCritic.evaluate() (continuous branch).

    Returns (action_logprobs (B,), state_values (B, 1), dist_entropy (B,),
             action_mean (B, A)).
    """
    f32 = jnp.float32
    (aw1, ab1, aw2, ab2, aw3, ab3, cw1, cb1, cw2, cb2, cw3, cb3) = params
    H = aw1.shape[1]            # 64 per-network hidden
    HF = 2 * H                  # 128 fused hidden width
    OUT = 128                   # lane-dense output slab width
    S = state.shape[-1]
    A = aw3.shape[1]
    assert A + 2 <= OUT, "action_dim too large for 128-lane output slab"

    state = state.reshape(-1, S).astype(f32)
    action = action.reshape(-1, A).astype(f32)   # handles action_dim == 1 case
    B = state.shape[0]

    # ---- distribution constants hoisted out of the kernel ----
    var = action_var.reshape(1, A).astype(f32)
    inv_var = 1.0 / var                                               # (1, A)
    logdet = jnp.sum(jnp.log(var))                                    # scalar
    c_half = 0.5 * (logdet + A * _LOG2PI)                             # scalar

    # ---- fuse actor + critic weights into a single 128-wide MLP ----
    w1 = jnp.concatenate([aw1, cw1], axis=1).astype(f32)              # (S, 128)
    b1 = jnp.concatenate([ab1, cb1], axis=1).astype(f32)              # (1, 128)
    w2 = (jnp.zeros((HF, HF), f32)
          .at[:H, :H].set(aw2)
          .at[H:, H:].set(cw2))                                       # block-diag
    b2 = jnp.concatenate([ab2, cb2], axis=1).astype(f32)              # (1, 128)
    w3 = (jnp.zeros((HF, OUT), f32)
          .at[:H, :A].set(aw3)                                        # mean cols
          .at[H:, A:A + 1].set(cw3))                                  # value col
    b3 = (jnp.zeros((1, OUT), f32)
          .at[:, :A].set(ab3)
          .at[:, A:A + 1].set(cb3)
          .at[:, A + 1].set(-c_half))                                 # logprob const

    # ---- batch tiling (multiple of 8 sublanes; pad B up to tile multiple) ----
    tb = int(min(block_b, -(-B // 8) * 8))
    tb = max(8, (tb // 8) * 8)
    Bp = -(-B // tb) * tb
    if Bp != B:
        state = jnp.pad(state, ((0, Bp - B), (0, 0)))
        action = jnp.pad(action, ((0, Bp - B), (0, 0)))
    grid = (Bp // tb,)

    def batched2(last):
        return pl.BlockSpec((tb, last), lambda i: (i, 0))

    def full2(shape):
        return pl.BlockSpec(shape, lambda i: (0, 0))

    flops = 2 * Bp * (S * HF + HF * HF + HF * OUT) + 6 * Bp * OUT
    bytes_accessed = 4 * (Bp * (S + A + OUT)
                          + w1.size + b1.size + w2.size + b2.size
                          + w3.size + b3.size + inv_var.size)

    out = pl.pallas_call(
        _fused_actor_critic_kernel,
        out_shape=jax.ShapeDtypeStruct((Bp, OUT), f32),
        grid=grid,
        in_specs=[
            batched2(S),                                  # state  (tiled)
            batched2(A),                                  # action (tiled)
            full2((1, A)),                                # inv_var (resident)
            full2((S, HF)), full2((1, HF)),               # fused W1, b1
            full2((HF, HF)), full2((1, HF)),              # fused W2, b2
            full2((HF, OUT)), full2((1, OUT)),            # fused W3, b3
        ],
        out_specs=batched2(OUT),
        compiler_params=pltpu.CompilerParams(
            dimension_semantics=("parallel",)),
        cost_estimate=pl.CostEstimate(
            flops=flops,
            transcendentals=2 * Bp * HF,
            bytes_accessed=bytes_accessed),
    )(state, action, inv_var, w1, b1, w2, b2, w3, b3)

    out = out[:B]
    mean = out[:, :A]
    values = out[:, A:A + 1]
    logprob = out[:, A + 1]
    # Entropy of a diagonal MVN is a per-row constant (depends only on var).
    entropy = jnp.full((B,), 0.5 * A * (1.0 + _LOG2PI), f32) + 0.5 * logdet
    return logprob, values, entropy, mean


def _init_linear(key, fan_in, fan_out):
    """PyTorch nn.Linear default init: U(-1/sqrt(fan_in), 1/sqrt(fan_in)).
    Returns (W_transposed (fan_in, fan_out), bias (1, fan_out))."""
    k = 1.0 / math.sqrt(fan_in)
    kw, kb = jax.random.split(key)
    w = jax.random.uniform(kw, (fan_in, fan_out), jnp.float32, -k, k)
    b = jax.random.uniform(kb, (1, fan_out), jnp.float32, -k, k)
    return w, b


def _reference_evaluate(state, action, action_var, params):
    (aw1, ab1, aw2, ab2, aw3, ab3, cw1, cb1, cw2, cb2, cw3, cb3) = params
    h = jnp.tanh(state @ aw1 + ab1)
    h = jnp.tanh(h @ aw2 + ab2)
    mean = h @ aw3 + ab3
    g = jnp.tanh(state @ cw1 + cb1)
    g = jnp.tanh(g @ cw2 + cb2)
    values = g @ cw3 + cb3
    var = action_var[0]
    A = var.shape[-1]
    diff = action - mean
    logprob = -0.5 * (jnp.sum(diff * diff / var, axis=-1)
                      + jnp.sum(jnp.log(var)) + A * _LOG2PI)
    entropy = 0.5 * (jnp.sum(jnp.log(var)) + A * (1.0 + _LOG2PI))
    entropy = jnp.full((state.shape[0],), entropy, jnp.float32)
    return logprob, values, entropy, mean


if __name__ == "__main__":
    B, state_dim, action_dim, hidden = 8, 16, 4, 64
    action_std_init = 0.6

    key = jax.random.PRNGKey(0)
    keys = jax.random.split(key, 8)

    # Actor: Linear(S,64) Tanh Linear(64,64) Tanh Linear(64,A)
    aw1, ab1 = _init_linear(keys[0], state_dim, hidden)
    aw2, ab2 = _init_linear(keys[1], hidden, hidden)
    aw3, ab3 = _init_linear(keys[2], hidden, action_dim)
    # Critic: Linear(S,64) Tanh Linear(64,64) Tanh Linear(64,1)
    cw1, cb1 = _init_linear(keys[3], state_dim, hidden)
    cw2, cb2 = _init_linear(keys[4], hidden, hidden)
    cw3, cb3 = _init_linear(keys[5], hidden, 1)
    params = (aw1, ab1, aw2, ab2, aw3, ab3, cw1, cb1, cw2, cb2, cw3, cb3)

    state = jax.random.normal(keys[6], (B, state_dim), jnp.float32)
    action = jax.random.normal(keys[7], (B, action_dim), jnp.float32)
    action_var = jnp.full((1, action_dim), action_std_init * action_std_init,
                          jnp.float32)

    # --- case 1: single-tile grid ---
    logprob, values, entropy, mean = actor_critic_evaluate(
        state, action, action_var, params)
    jax.block_until_ready((logprob, values, entropy, mean))
    r_logprob, r_values, r_entropy, r_mean = _reference_evaluate(
        state, action, action_var, params)
    assert jnp.allclose(logprob, r_logprob, atol=1e-4, rtol=1e-4)
    assert jnp.allclose(values, r_values, atol=1e-4, rtol=1e-4)
    assert jnp.allclose(entropy, r_entropy, atol=1e-4, rtol=1e-4)
    assert jnp.allclose(mean, r_mean, atol=1e-4, rtol=1e-4)

    # --- case 2: multi-tile grid with batch padding (B=20, block_b=8 -> 3 steps) ---
    B2 = 20
    k2 = jax.random.split(keys[7], 2)
    state2 = jax.random.normal(k2[0], (B2, state_dim), jnp.float32)
    action2 = jax.random.normal(k2[1], (B2, action_dim), jnp.float32)
    logprob2, values2, entropy2, mean2 = actor_critic_evaluate(
        state2, action2, action_var, params, block_b=8)
    jax.block_until_ready((logprob2, values2, entropy2, mean2))
    rl, rv, re, rm = _reference_evaluate(state2, action2, action_var, params)
    assert jnp.allclose(logprob2, rl, atol=1e-4, rtol=1e-4)
    assert jnp.allclose(values2, rv, atol=1e-4, rtol=1e-4)
    assert jnp.allclose(entropy2, re, atol=1e-4, rtol=1e-4)
    assert jnp.allclose(mean2, rm, atol=1e-4, rtol=1e-4)

    print("KERNEL_OK")
</pallas_src>

<mosaic_0001>
module attributes {stable_mosaic.version = 11 : i64} {
  func.func @_fused_actor_critic_kernel(%arg0: i32, %arg1: memref<8x16xf32, #tpu.memory_space<vmem>>, %arg2: memref<8x4xf32, #tpu.memory_space<vmem>>, %arg3: memref<1x4xf32, #tpu.memory_space<vmem>>, %arg4: memref<16x128xf32, #tpu.memory_space<vmem>>, %arg5: memref<1x128xf32, #tpu.memory_space<vmem>>, %arg6: memref<128x128xf32, #tpu.memory_space<vmem>>, %arg7: memref<1x128xf32, #tpu.memory_space<vmem>>, %arg8: memref<128x128xf32, #tpu.memory_space<vmem>>, %arg9: memref<1x128xf32, #tpu.memory_space<vmem>>, %arg10: memref<8x128xf32, #tpu.memory_space<vmem>>) attributes {dimension_semantics = [#tpu.dimension_semantics<parallel>], iteration_bounds = array<i64: 1>, scalar_prefetch = 0 : i64, scratch_operands = 0 : i64, tpu.core_type = #tpu.core_type<tc>, window_params = [{transform_indices = @transform_0, window_bounds = array<i64: 8, 16>}, {transform_indices = @transform_1, window_bounds = array<i64: 8, 4>}, {pipeline_mode = #tpu.pipeline_mode<synchronous>, transform_indices = @transform_2, window_bounds = array<i64: 1, 4>}, {pipeline_mode = #tpu.pipeline_mode<synchronous>, transform_indices = @transform_3, window_bounds = array<i64: 16, 128>}, {pipeline_mode = #tpu.pipeline_mode<synchronous>, transform_indices = @transform_4, window_bounds = array<i64: 1, 128>}, {pipeline_mode = #tpu.pipeline_mode<synchronous>, transform_indices = @transform_5, window_bounds = array<i64: 128, 128>}, {pipeline_mode = #tpu.pipeline_mode<synchronous>, transform_indices = @transform_6, window_bounds = array<i64: 1, 128>}, {pipeline_mode = #tpu.pipeline_mode<synchronous>, transform_indices = @transform_7, window_bounds = array<i64: 128, 128>}, {pipeline_mode = #tpu.pipeline_mode<synchronous>, transform_indices = @transform_8, window_bounds = array<i64: 1, 128>}, {transform_indices = @transform_9, window_bounds = array<i64: 8, 128>}]} {
    %c0 = arith.constant 0 : index
    %c0_0 = arith.constant 0 : index
    %0 = vector.load %arg1[%c0, %c0_0] : memref<8x16xf32, #tpu.memory_space<vmem>>, vector<8x16xf32>
    %c0_1 = arith.constant 0 : index
    %c0_2 = arith.constant 0 : index
    %1 = vector.load %arg4[%c0_1, %c0_2] : memref<16x128xf32, #tpu.memory_space<vmem>>, vector<16x128xf32>
    %cst = arith.constant dense<0.000000e+00> : vector<8x128xf32>
    %2 = tpu.matmul %0, %1, %cst {dimension_numbers = #tpu.dot_dimension_numbers<[1], [0], [0], [1], [0, 0, 1, 1], [], []>} : vector<8x16xf32>, vector<16x128xf32>, vector<8x128xf32> -> vector<8x128xf32>
    %c0_3 = arith.constant 0 : index
    %c0_4 = arith.constant 0 : index
    %3 = vector.load %arg5[%c0_3, %c0_4] : memref<1x128xf32, #tpu.memory_space<vmem>>, vector<1x128xf32>
    %4 = vector.broadcast %3 : vector<1x128xf32> to vector<8x128xf32>
    %5 = arith.addf %2, %4 : vector<8x128xf32>
    %6 = math.tanh %5 : vector<8x128xf32>
    %c0_5 = arith.constant 0 : index
    %c0_6 = arith.constant 0 : index
    %7 = vector.load %arg6[%c0_5, %c0_6] : memref<128x128xf32, #tpu.memory_space<vmem>>, vector<128x128xf32>
    %cst_7 = arith.constant dense<0.000000e+00> : vector<8x128xf32>
    %8 = tpu.matmul %6, %7, %cst_7 {dimension_numbers = #tpu.dot_dimension_numbers<[1], [0], [0], [1], [0, 0, 1, 1], [], []>} : vector<8x128xf32>, vector<128x128xf32>, vector<8x128xf32> -> vector<8x128xf32>
    %c0_8 = arith.constant 0 : index
    %c0_9 = arith.constant 0 : index
    %9 = vector.load %arg7[%c0_8, %c0_9] : memref<1x128xf32, #tpu.memory_space<vmem>>, vector<1x128xf32>
    %10 = vector.broadcast %9 : vector<1x128xf32> to vector<8x128xf32>
    %11 = arith.addf %8, %10 : vector<8x128xf32>
    %12 = math.tanh %11 : vector<8x128xf32>
    %c0_10 = arith.constant 0 : index
    %c0_11 = arith.constant 0 : index
    %13 = vector.load %arg8[%c0_10, %c0_11] : memref<128x128xf32, #tpu.memory_space<vmem>>, vector<128x128xf32>
    %cst_12 = arith.constant dense<0.000000e+00> : vector<8x128xf32>
    %14 = tpu.matmul %12, %13, %cst_12 {dimension_numbers = #tpu.dot_dimension_numbers<[1], [0], [0], [1], [0, 0, 1, 1], [], []>} : vector<8x128xf32>, vector<128x128xf32>, vector<8x128xf32> -> vector<8x128xf32>
    %c0_13 = arith.constant 0 : index
    %c0_14 = arith.constant 0 : index
    %15 = vector.load %arg9[%c0_13, %c0_14] : memref<1x128xf32, #tpu.memory_space<vmem>>, vector<1x128xf32>
    %16 = vector.broadcast %15 : vector<1x128xf32> to vector<8x128xf32>
    %17 = arith.addf %14, %16 : vector<8x128xf32>
    %18 = vector.extract_strided_slice %17 {offsets = [0, 0], sizes = [8, 4], strides = [1, 1]} : vector<8x128xf32> to vector<8x4xf32>
    %c0_15 = arith.constant 0 : index
    %c0_16 = arith.constant 0 : index
    %19 = vector.load %arg2[%c0_15, %c0_16] : memref<8x4xf32, #tpu.memory_space<vmem>>, vector<8x4xf32>
    %20 = arith.subf %19, %18 : vector<8x4xf32>
    %21 = arith.mulf %20, %20 : vector<8x4xf32>
    %c0_17 = arith.constant 0 : index
    %c0_18 = arith.constant 0 : index
    %22 = vector.load %arg3[%c0_17, %c0_18] : memref<1x4xf32, #tpu.memory_space<vmem>>, vector<1x4xf32>
    %23 = vector.broadcast %22 : vector<1x4xf32> to vector<8x4xf32>
    %24 = arith.mulf %21, %23 : vector<8x4xf32>
    %cst_19 = arith.constant dense<0.000000e+00> : vector<8xf32>
    %25 = vector.multi_reduction <add>, %24, %cst_19 [1] : vector<8x4xf32> to vector<8xf32>
    %26 = vector.shape_cast %25 : vector<8xf32> to vector<8x1xf32>
    %27 = vector.extract_strided_slice %17 {offsets = [0, 5], sizes = [8, 1], strides = [1, 1]} : vector<8x128xf32> to vector<8x1xf32>
    %cst_20 = arith.constant 5.000000e-01 : f32
    %28 = vector.broadcast %cst_20 : f32 to vector<8x1xf32>
    %29 = arith.mulf %28, %26 : vector<8x1xf32>
    %30 = arith.subf %27, %29 : vector<8x1xf32>
    %31 = tpu.iota {dimensions = array<i32: 1>} : vector<8x128xi32>
    %c5_i32 = arith.constant 5 : i32
    %32 = vector.broadcast %c5_i32 : i32 to vector<8x128xi32>
    %33 = arith.cmpi eq, %31, %32 : vector<8x128xi32>
    %34 = vector.shape_cast %30 : vector<8x1xf32> to vector<8x1xf32>
    %35 = vector.broadcast %34 : vector<8x1xf32> to vector<8x128xf32>
    %36 = arith.select %33, %35, %17 : vector<8x128xi1>, vector<8x128xf32>
    %c0_21 = arith.constant 0 : index
    %c0_22 = arith.constant 0 : index
    %37 = vector.load %arg10[%c0_21, %c0_22] : memref<8x128xf32, #tpu.memory_space<vmem>>, vector<8x128xf32>
    tpu.vector_store %arg10[%c0_21, %c0_22], %36 {strides = array<i32>} : memref<8x128xf32, #tpu.memory_space<vmem>>, vector<8x128xf32>,
    return
  }
  func.func @transform_0(%arg0: i32) -> (i32, i32) {
    %c0_i32 = arith.constant 0 : i32
    %c0_i32_0 = arith.constant 0 : i32
    return %arg0, %c0_i32 : i32, i32
  }
  func.func @transform_1(%arg0: i32) -> (i32, i32) {
    %c0_i32 = arith.constant 0 : i32
    %c0_i32_0 = arith.constant 0 : i32
    return %arg0, %c0_i32 : i32, i32
  }
  func.func @transform_2(%arg0: i32) -> (i32, i32) {
    %c0_i32 = arith.constant 0 : i32
    %c0_i32_0 = arith.constant 0 : i32
    %c0_i32_1 = arith.constant 0 : i32
    return %c0_i32, %c0_i32_0 : i32, i32
  }
  func.func @transform_3(%arg0: i32) -> (i32, i32) {
    %c0_i32 = arith.constant 0 : i32
    %c0_i32_0 = arith.constant 0 : i32
    %c0_i32_1 = arith.constant 0 : i32
    return %c0_i32, %c0_i32_0 : i32, i32
  }
  func.func @transform_4(%arg0: i32) -> (i32, i32) {
    %c0_i32 = arith.constant 0 : i32
    %c0_i32_0 = arith.constant 0 : i32
    %c0_i32_1 = arith.constant 0 : i32
    return %c0_i32, %c0_i32_0 : i32, i32
  }
  func.func @transform_5(%arg0: i32) -> (i32, i32) {
    %c0_i32 = arith.constant 0 : i32
    %c0_i32_0 = arith.constant 0 : i32
    %c0_i32_1 = arith.constant 0 : i32
    return %c0_i32, %c0_i32_0 : i32, i32
  }
  func.func @transform_6(%arg0: i32) -> (i32, i32) {
    %c0_i32 = arith.constant 0 : i32
    %c0_i32_0 = arith.constant 0 : i32
    %c0_i32_1 = arith.constant 0 : i32
    return %c0_i32, %c0_i32_0 : i32, i32
  }
  func.func @transform_7(%arg0: i32) -> (i32, i32) {
    %c0_i32 = arith.constant 0 : i32
    %c0_i32_0 = arith.constant 0 : i32
    %c0_i32_1 = arith.constant 0 : i32
    return %c0_i32, %c0_i32_0 : i32, i32
  }
  func.func @transform_8(%arg0: i32) -> (i32, i32) {
    %c0_i32 = arith.constant 0 : i32
    %c0_i32_0 = arith.constant 0 : i32
    %c0_i32_1 = arith.constant 0 : i32
    return %c0_i32, %c0_i32_0 : i32, i32
  }
  func.func @transform_9(%arg0: i32) -> (i32, i32) {
    %c0_i32 = arith.constant 0 : i32
    %c0_i32_0 = arith.constant 0 : i32
    return %arg0, %c0_i32 : i32, i32
  }
}

</mosaic_0001>

<llo_original>
// kernel: tpu_custom_call.1
$region0: #{tpu_custom_call.1}
  #allocation0 [shape = 'u32[]', space=smem, size = 0x4, offset = 0x4, fixed_abs, tag = 'smem constant byte address 0x4 - core index']
  #allocation1 [shape = 'u32[144,128]{1,0:T(1,128)}', space=vmem, size = 0x12000, scoped, tag = 'internal scratch']
  %s0 = inlined_call_operand.hbm [shape: f32[8,16], index: 0, kind: input, shape index: {}]
  %s1 = inlined_call_operand.vmem [shape: f32[8,4], index: 1, kind: input, shape index: {}]
  %s2 = inlined_call_operand.vmem [shape: f32[1,4], index: 2, kind: input, shape index: {}]
  %s3 = inlined_call_operand.vmem [shape: f32[16,128], index: 3, kind: input, shape index: {}]
  %s4 = inlined_call_operand.vmem [shape: f32[1,128], index: 4, kind: input, shape index: {}]
  %s5 = inlined_call_operand.hbm [shape: f32[128,128], index: 5, kind: input, shape index: {}]
  %s6 = inlined_call_operand.vmem [shape: f32[1,128], index: 6, kind: input, shape index: {}]
  %s7 = inlined_call_operand.hbm [shape: f32[128,128], index: 7, kind: input, shape index: {}]
  %s8 = inlined_call_operand.vmem [shape: f32[1,128], index: 8, kind: input, shape index: {}]
  %s9 = inlined_call_operand.hbm [shape: f32[8,128], index: 9, kind: output, shape index: {}]
  %s10 = sld [smem:[#allocation0]]
  $region58: #{tpu_custom_call.1} parent=0
    _
  %s12 = ssub.s32 1, %s10
  %s13 = scalar_select 0, %s12, %s10
  $region1: #{tpu_custom_call.1} parent=0
    #allocation2 [shape = 'u8[4096]{0}', space=vmem, size = 0x1000, scoped, tag = 'input window, operand 0, single buffered']
    #allocation3 [shape = 's32[1]{0}', space=sflag, size = 0x4, scoped, tag = 'scoped memory for tpu_custom_call.1']
    #allocation4 [shape = 's32[1]{0}', space=sflag, size = 0x4, scoped, tag = 'scoped memory for tpu_custom_call.1']
    #allocation5 [shape = 'u8[65536]{0}', space=vmem, size = 0x10000, scoped, tag = 'input window, operand 5, single buffered']
    #allocation6 [shape = 's32[1]{0}', space=sflag, size = 0x4, scoped, tag = 'scoped memory for tpu_custom_call.1']
    #allocation7 [shape = 'u8[65536]{0}', space=vmem, size = 0x10000, scoped, tag = 'input window, operand 7, single buffered']
    #allocation8 [shape = 'u8[4096]{0}', space=vmem, size = 0x1000, scoped, tag = 'output window, operand 0, single buffered']
    %14 = vsyncpa [#allocation3], 0
    %15 = vsyncpa [#allocation6], 0
    %16 = vsyncpa [#allocation4], 0
    // Predicated region
    $region2: #{tpu_custom_call.1} parent=1 // pred_check
      _
    $region3: #{tpu_custom_call.1} parent=1 // pred_check_branch
      %18 = sbr.rel (0) target = $region5
    $region4: #{tpu_custom_call.1} parent=1 // pred_region
      %s20 = ssub.s32 128, 128
      %21 = vsyncadd [#allocation3], %s20
      %s23 = sshll.u32 [#allocation2], 4
      %s24 = int_to_ptr.vmem [resolvable:$true] %s23
      %26 = dma.hbm_to_vmem [thread:$0]  %s0, 128, %s24, [#allocation3]
    $region5: #{tpu_custom_call.1} parent=1 // pred_fallthru
      _
    // Predicated region
    $region6: #{tpu_custom_call.1} parent=1 // pred_check
      _
    $region7: #{tpu_custom_call.1} parent=1 // pred_check_branch
      %28 = sbr.rel (0) target = $region9
    $region8: #{tpu_custom_call.1} parent=1 // pred_region
      _
    $region9: #{tpu_custom_call.1} parent=1 // pred_fallthru
      _
    // Predicated region
    $region10: #{tpu_custom_call.1} parent=1 // pred_check
      _
    $region11: #{tpu_custom_call.1} parent=1 // pred_check_branch
      %30 = sbr.rel (0) target = $region13
    $region12: #{tpu_custom_call.1} parent=1 // pred_region
      _
    $region13: #{tpu_custom_call.1} parent=1 // pred_fallthru
      _
    // Predicated region
    $region14: #{tpu_custom_call.1} parent=1 // pred_check
      _
    $region15: #{tpu_custom_call.1} parent=1 // pred_check_branch
      %32 = sbr.rel (0) target = $region17
    $region16: #{tpu_custom_call.1} parent=1 // pred_region
      _
    $region17: #{tpu_custom_call.1} parent=1 // pred_fallthru
      _
    // Predicated region
    $region18: #{tpu_custom_call.1} parent=1 // pred_check
      _
    $region19: #{tpu_custom_call.1} parent=1 // pred_check_branch
      %34 = sbr.rel (0) target = $region21
    $region20: #{tpu_custom_call.1} parent=1 // pred_region
      _
    $region21: #{tpu_custom_call.1} parent=1 // pred_fallthru
      _
    // Predicated region
    $region22: #{tpu_custom_call.1} parent=1 // pred_check
      _
    $region23: #{tpu_custom_call.1} parent=1 // pred_check_branch
      %36 = sbr.rel (0) target = $region25
    $region24: #{tpu_custom_call.1} parent=1 // pred_region
      %s38 = ssub.s32 2048, 2048
      %39 = vsyncadd [#allocation6], %s38
      %s40 = sshll.u32 [#allocation5], 4
      %s41 = int_to_ptr.vmem [resolvable:$true] %s40
      %46 = dma.hbm_to_vmem [thread:$0]  %s5, 2048, %s41, [#allocation6], 128, 128, 8
    $region25: #{tpu_custom_call.1} parent=1 // pred_fallthru
      _
    // Predicated region
    $region26: #{tpu_custom_call.1} parent=1 // pred_check
      _
    $region27: #{tpu_custom_call.1} parent=1 // pred_check_branch
      %48 = sbr.rel (0) target = $region29
    $region28: #{tpu_custom_call.1} parent=1 // pred_region
      _
    $region29: #{tpu_custom_call.1} parent=1 // pred_fallthru
      _
    // Predicated region
    $region30: #{tpu_custom_call.1} parent=1 // pred_check
      _
    $region31: #{tpu_custom_call.1} parent=1 // pred_check_branch
      %50 = sbr.rel (0) target = $region33
    $region32: #{tpu_custom_call.1} parent=1 // pred_region
      %s52 = ssub.s32 2048, 2048
      %53 = vsyncadd [#allocation6], %s52
      %s54 = sshll.u32 [#allocation7], 4
      %s55 = int_to_ptr.vmem [resolvable:$true] %s54
      %60 = dma.hbm_to_vmem [thread:$0]  %s7, 2048, %s55, [#allocation6], 128, 128, 8
    $region33: #{tpu_custom_call.1} parent=1 // pred_fallthru
      _
    // Predicated region
    $region34: #{tpu_custom_call.1} parent=1 // pred_check
      _
    $region35: #{tpu_custom_call.1} parent=1 // pred_check_branch
      %62 = sbr.rel (0) target = $region37
    $region36: #{tpu_custom_call.1} parent=1 // pred_region
      _
    $region37: #{tpu_custom_call.1} parent=1 // pred_fallthru
      _
    // Predicated region
    $region38: #{tpu_custom_call.1} parent=1 // pred_check
      _
    $region39: #{tpu_custom_call.1} parent=1 // pred_check_branch
      %64 = sbr.rel (0) target = $region41
    $region40: #{tpu_custom_call.1} parent=1 // pred_region
      %65 = dma.done [#allocation3], 128
    $region41: #{tpu_custom_call.1} parent=1 // pred_fallthru
      _
    // Predicated region
    $region42: #{tpu_custom_call.1} parent=1 // pred_check
      _
    $region43: #{tpu_custom_call.1} parent=1 // pred_check_branch
      %67 = sbr.rel (0) target = $region45
    $region44: #{tpu_custom_call.1} parent=1 // pred_region
      %68 = dma.done [#allocation6], 2048
    $region45: #{tpu_custom_call.1} parent=1 // pred_fallthru
      _
    // Predicated region
    $region46: #{tpu_custom_call.1} parent=1 // pred_check
      _
    $region47: #{tpu_custom_call.1} parent=1 // pred_check_branch
      %70 = sbr.rel (0) target = $region49
    $region48: #{tpu_custom_call.1} parent=1 // pred_region
      %71 = dma.done [#allocation6], 2048
    $region49: #{tpu_custom_call.1} parent=1 // pred_fallthru
      _
    %v72 = vld [vmem:[#allocation2] sm:$0xff]
    %v73 = vld [vmem:[%s3] sm:$0xff]
    %v74 = vld [vmem:[%s3 + $0x8] sm:$0xff]
    %v75 = vld [vmem:[%s4] sm:$0x1]
    %v77 = vlaneseq
    %v78 = vshrl.u32 %v77, 7
    %v79 = vsub.s32 0, %v78
    %v80 = vrot.slane %v75, %v79
    %vm82 = vcmask 130048
    %v84 = vsel %vm82, %v72, 0
    %86 = vmatprep.subr.mxu0 0.0
    %87 = vmatpush1.msra.mxu0 %v73
    %88 = vmatprep.subr.mxu0 0.0
    %89 = vmatpush1.msra.mxu0 %v74
    %90 = vmatprep.subr.mxu0 0.0
    %91 = vmatpush1.msra.mxu0 0.0
    %92 = vmatprep.subr.mxu0 0.0
    %93 = vmatpush1.msra.mxu0 0.0
    %94 = vmatprep.subr.mxu0 0.0
    %95 = vmatpush1.msra.mxu0 0.0
    %96 = vmatprep.subr.mxu0 0.0
    %97 = vmatpush1.msra.mxu0 0.0
    %98 = vmatprep.subr.mxu0 0.0
    %99 = vmatpush1.msra.mxu0 0.0
    %100 = vmatprep.subr.mxu0 0.0
    %101 = vmatpush1.msra.mxu0 0.0
    %102 = vmatprep.subr.mxu0 0.0
    %103 = vmatpush1.msra.mxu0 0.0
    %104 = vmatprep.subr.mxu0 0.0
    %105 = vmatpush1.msra.mxu0 0.0
    %106 = vmatprep.subr.mxu0 0.0
    %107 = vmatpush1.msra.mxu0 0.0
    %108 = vmatprep.subr.mxu0 0.0
    %109 = vmatpush1.msra.mxu0 0.0
    %110 = vmatprep.subr.mxu0 0.0
    %111 = vmatpush1.msra.mxu0 0.0
    %112 = vmatprep.subr.mxu0 0.0
    %113 = vmatpush1.msra.mxu0 0.0
    %114 = vmatprep.subr.mxu0 0.0
    %115 = vmatpush1.msra.mxu0 0.0
    %116 = vmatprep.subr.mxu0 0.0
    %117 = vmatpush1.msra.mxu0 0.0
    %118 = vmatprep.subr.mxu0 0.0
    %119 = vmatpush1.msra.mxu0 0.0
    %120 = vmatprep.subr.mxu0 0.0
    %121 = vmatpush1.msra.mxu0 0.0
    %122 = vmatprep.subr.mxu0 0.0
    %123 = vmatpush1.msra.mxu0 0.0
    %124 = vmatprep.subr.mxu0 0.0
    %125 = vmatpush1.msra.mxu0 0.0
    %126 = vmatprep.subr.mxu0 0.0
    %127 = vmatpush1.msra.mxu0 0.0
    %128 = vmatprep.subr.mxu0 0.0
    %129 = vmatpush1.msra.mxu0 0.0
    %130 = vmatprep.subr.mxu0 0.0
    %131 = vmatpush1.msra.mxu0 0.0
    %132 = vmatprep.subr.mxu0 0.0
    %133 = vmatpush1.msra.mxu0 0.0
    %134 = vmatprep.subr.mxu0 0.0
    %135 = vmatpush1.msra.mxu0 0.0
    %136 = vmatprep.subr.mxu0 0.0
    %137 = vmatpush1.msra.mxu0 0.0
    %138 = vmatprep.subr.mxu0 0.0
    %139 = vmatpush1.msra.mxu0 0.0
    %140 = vmatprep.subr.mxu0 0.0
    %141 = vmatpush1.msra.mxu0 0.0
    %142 = vmatprep.subr.mxu0 0.0
    %143 = vmatpush1.msra.mxu0 0.0
    %144 = vmatprep.subr.mxu0 0.0
    %145 = vmatpush1.msra.mxu0 0.0
    %146 = vmatprep.subr.mxu0 0.0
    %147 = vmatpush1.msra.mxu0 0.0
    %148 = vmatprep.subr.mxu0 0.0
    %149 = vmatpush1.msra.mxu0 0.0
    %150 = vmatprep.mubr.f32.mxu0 0.0
    %151 = vmatmul.mubr.f32.gmra.mrb[0].mxu0 %v84
    %v152 = vpop.f32.mrb[0].mxu0
    %v153 = vadd.f32 %v80, %v152
    %v154 = vpop.f32.mrb[0].mxu0
    %155 = vdwg.mxu0
    %v156 = vtanh.pop %v153
    %v157 = vld [vmem:[#allocation5] sm:$0xff]
    %v158 = vld [vmem:[#allocation5 + $0x8] sm:$0xff]
    %v159 = vld [vmem:[#allocation5 + $0x10] sm:$0xff]
    %v160 = vld [vmem:[#allocation5 + $0x18] sm:$0xff]
    %v161 = vld [vmem:[#allocation5 + $0x20] sm:$0xff]
    %v162 = vld [vmem:[#allocation5 + $0x28] sm:$0xff]
    %v163 = vld [vmem:[#allocation5 + $0x30] sm:$0xff]
    %v164 = vld [vmem:[#allocation5 + $0x38] sm:$0xff]
    %v165 = vld [vmem:[#allocation5 + $0x40] sm:$0xff]
    %v166 = vld [vmem:[#allocation5 + $0x48] sm:$0xff]
    %v167 = vld [vmem:[#allocation5 + $0x50] sm:$0xff]
    %v168 = vld [vmem:[#allocation5 + $0x58] sm:$0xff]
    %v169 = vld [vmem:[#allocation5 + $0x60] sm:$0xff]
    %v170 = vld [vmem:[#allocation5 + $0x68] sm:$0xff]
    %v171 = vld [vmem:[#allocation5 + $0x70] sm:$0xff]
    %v172 = vld [vmem:[#allocation5 + $0x78] sm:$0xff]
    %v173 = vld [vmem:[%s6] sm:$0x1]
    %v175 = vlaneseq
    %v176 = vshrl.u32 %v175, 7
    %v177 = vsub.s32 0, %v176
    %v178 = vrot.slane %v173, %v177
    %180 = vmatprep.subr.mxu0 0.0
    %181 = vmatpush1.msra.mxu0 %v157
    %182 = vmatprep.subr.mxu0 0.0
    %183 = vmatpush1.msra.mxu0 %v158
    %184 = vmatprep.subr.mxu0 0.0
    %185 = vmatpush1.msra.mxu0 %v159
    %186 = vmatprep.subr.mxu0 0.0
    %187 = vmatpush1.msra.mxu0 %v160
    %188 = vmatprep.subr.mxu0 0.0
    %189 = vmatpush1.msra.mxu0 %v161
    %190 = vmatprep.subr.mxu0 0.0
    %191 = vmatpush1.msra.mxu0 %v162
    %192 = vmatprep.subr.mxu0 0.0
    %193 = vmatpush1.msra.mxu0 %v163
    %194 = vmatprep.subr.mxu0 0.0
    %195 = vmatpush1.msra.mxu0 %v164
    %196 = vmatprep.subr.mxu0 0.0
    %197 = vmatpush1.msra.mxu0 %v165
    %198 = vmatprep.subr.mxu0 0.0
    %199 = vmatpush1.msra.mxu0 %v166
    %200 = vmatprep.subr.mxu0 0.0
    %201 = vmatpush1.msra.mxu0 %v167
    %202 = vmatprep.subr.mxu0 0.0
    %203 = vmatpush1.msra.mxu0 %v168
    %204 = vmatprep.subr.mxu0 0.0
    %205 = vmatpush1.msra.mxu0 %v169
    %206 = vmatprep.subr.mxu0 0.0
    %207 = vmatpush1.msra.mxu0 %v170
    %208 = vmatprep.subr.mxu0 0.0
    %209 = vmatpush1.msra.mxu0 %v171
    %210 = vmatprep.subr.mxu0 0.0
    %211 = vmatpush1.msra.mxu0 %v172
    %212 = vmatprep.subr.mxu0 0.0
    %213 = vmatpush1.msra.mxu0 0.0
    %214 = vmatprep.subr.mxu0 0.0
    %215 = vmatpush1.msra.mxu0 0.0
    %216 = vmatprep.subr.mxu0 0.0
    %217 = vmatpush1.msra.mxu0 0.0
    %218 = vmatprep.subr.mxu0 0.0
    %219 = vmatpush1.msra.mxu0 0.0
    %220 = vmatprep.subr.mxu0 0.0
    %221 = vmatpush1.msra.mxu0 0.0
    %222 = vmatprep.subr.mxu0 0.0
    %223 = vmatpush1.msra.mxu0 0.0
    %224 = vmatprep.subr.mxu0 0.0
    %225 = vmatpush1.msra.mxu0 0.0
    %226 = vmatprep.subr.mxu0 0.0
    %227 = vmatpush1.msra.mxu0 0.0
    %228 = vmatprep.subr.mxu0 0.0
    %229 = vmatpush1.msra.mxu0 0.0
    %230 = vmatprep.subr.mxu0 0.0
    %231 = vmatpush1.msra.mxu0 0.0
    %232 = vmatprep.subr.mxu0 0.0
    %233 = vmatpush1.msra.mxu0 0.0
    %234 = vmatprep.subr.mxu0 0.0
    %235 = vmatpush1.msra.mxu0 0.0
    %236 = vmatprep.subr.mxu0 0.0
    %237 = vmatpush1.msra.mxu0 0.0
    %238 = vmatprep.subr.mxu0 0.0
    %239 = vmatpush1.msra.mxu0 0.0
    %240 = vmatprep.subr.mxu0 0.0
    %241 = vmatpush1.msra.mxu0 0.0
    %242 = vmatprep.subr.mxu0 0.0
    %243 = vmatpush1.msra.mxu0 0.0
    %244 = vmatprep.mubr.f32.mxu0 0.0
    %245 = vmatmul.mubr.f32.gmra.mrb[0].mxu0 %v156
    %v246 = vpop.f32.mrb[0].mxu0
    %v247 = vadd.f32 %v178, %v246
    %v248 = vpop.f32.mrb[0].mxu0
    %249 = vdwg.mxu0
    %v250 = vtanh.pop %v247
    %v251 = vld [vmem:[#allocation7] sm:$0xff]
    %v252 = vld [vmem:[#allocation7 + $0x8] sm:$0xff]
    %v253 = vld [vmem:[#allocation7 + $0x10] sm:$0xff]
    %v254 = vld [vmem:[#allocation7 + $0x18] sm:$0xff]
    %v255 = vld [vmem:[#allocation7 + $0x20] sm:$0xff]
    %v256 = vld [vmem:[#allocation7 + $0x28] sm:$0xff]
    %v257 = vld [vmem:[#allocation7 + $0x30] sm:$0xff]
    %v258 = vld [vmem:[#allocation7 + $0x38] sm:$0xff]
    %v259 = vld [vmem:[#allocation7 + $0x40] sm:$0xff]
    %v260 = vld [vmem:[#allocation7 + $0x48] sm:$0xff]
    %v261 = vld [vmem:[#allocation7 + $0x50] sm:$0xff]
    %v262 = vld [vmem:[#allocation7 + $0x58] sm:$0xff]
    %v263 = vld [vmem:[#allocation7 + $0x60] sm:$0xff]
    %v264 = vld [vmem:[#allocation7 + $0x68] sm:$0xff]
    %v265 = vld [vmem:[#allocation7 + $0x70] sm:$0xff]
    %v266 = vld [vmem:[#allocation7 + $0x78] sm:$0xff]
    %v267 = vld [vmem:[%s8] sm:$0x1]
    %v269 = vlaneseq
    %v270 = vshrl.u32 %v269, 7
    %v271 = vsub.s32 0, %v270
    %v272 = vrot.slane %v267, %v271
    %274 = vmatprep.subr.mxu0 0.0
    %275 = vmatpush1.msra.mxu0 %v251
    %276 = vmatprep.subr.mxu0 0.0
    %277 = vmatpush1.msra.mxu0 %v252
    %278 = vmatprep.subr.mxu0 0.0
    %279 = vmatpush1.msra.mxu0 %v253
    %280 = vmatprep.subr.mxu0 0.0
    %281 = vmatpush1.msra.mxu0 %v254
    %282 = vmatprep.subr.mxu0 0.0
    %283 = vmatpush1.msra.mxu0 %v255
    %284 = vmatprep.subr.mxu0 0.0
    %285 = vmatpush1.msra.mxu0 %v256
    %286 = vmatprep.subr.mxu0 0.0
    %287 = vmatpush1.msra.mxu0 %v257
    %288 = vmatprep.subr.mxu0 0.0
    %289 = vmatpush1.msra.mxu0 %v258
    %290 = vmatprep.subr.mxu0 0.0
    %291 = vmatpush1.msra.mxu0 %v259
    %292 = vmatprep.subr.mxu0 0.0
    %293 = vmatpush1.msra.mxu0 %v260
    %294 = vmatprep.subr.mxu0 0.0
    %295 = vmatpush1.msra.mxu0 %v261
    %296 = vmatprep.subr.mxu0 0.0
    %297 = vmatpush1.msra.mxu0 %v262
    %298 = vmatprep.subr.mxu0 0.0
    %299 = vmatpush1.msra.mxu0 %v263
    %300 = vmatprep.subr.mxu0 0.0
    %301 = vmatpush1.msra.mxu0 %v264
    %302 = vmatprep.subr.mxu0 0.0
    %303 = vmatpush1.msra.mxu0 %v265
    %304 = vmatprep.subr.mxu0 0.0
    %305 = vmatpush1.msra.mxu0 %v266
    %306 = vmatprep.subr.mxu0 0.0
    %307 = vmatpush1.msra.mxu0 0.0
    %308 = vmatprep.subr.mxu0 0.0
    %309 = vmatpush1.msra.mxu0 0.0
    %310 = vmatprep.subr.mxu0 0.0
    %311 = vmatpush1.msra.mxu0 0.0
    %312 = vmatprep.subr.mxu0 0.0
    %313 = vmatpush1.msra.mxu0 0.0
    %314 = vmatprep.subr.mxu0 0.0
    %315 = vmatpush1.msra.mxu0 0.0
    %316 = vmatprep.subr.mxu0 0.0
    %317 = vmatpush1.msra.mxu0 0.0
    %318 = vmatprep.subr.mxu0 0.0
    %319 = vmatpush1.msra.mxu0 0.0
    %320 = vmatprep.subr.mxu0 0.0
    %321 = vmatpush1.msra.mxu0 0.0
    %322 = vmatprep.subr.mxu0 0.0
    %323 = vmatpush1.msra.mxu0 0.0
    %324 = vmatprep.subr.mxu0 0.0
    %325 = vmatpush1.msra.mxu0 0.0
    %326 = vmatprep.subr.mxu0 0.0
    %327 = vmatpush1.msra.mxu0 0.0
    %328 = vmatprep.subr.mxu0 0.0
    %329 = vmatpush1.msra.mxu0 0.0
    %330 = vmatprep.subr.mxu0 0.0
    %331 = vmatpush1.msra.mxu0 0.0
    %332 = vmatprep.subr.mxu0 0.0
    %333 = vmatpush1.msra.mxu0 0.0
    %334 = vmatprep.subr.mxu0 0.0
    %335 = vmatpush1.msra.mxu0 0.0
    %336 = vmatprep.subr.mxu0 0.0
    %337 = vmatpush1.msra.mxu0 0.0
    %338 = vmatprep.mubr.f32.mxu0 0.0
    %339 = vmatmul.mubr.f32.gmra.mrb[0].mxu0 %v250
    %v340 = vpop.f32.mrb[0].mxu0
    %v341 = vadd.f32 %v272, %v340
    %v342 = vpop.f32.mrb[0].mxu0
    %343 = vdwg.mxu0
    %v344 = vld [vmem:[%s1] sm:$0xff]
    %v345 = vsub.f32 %v344, %v341
    %v346 = vmul.f32 %v345, %v345
    %v347 = vld [vmem:[%s2] sm:$0x1]
    %v349 = vlaneseq
    %v350 = vshrl.u32 %v349, 7
    %v351 = vsub.s32 0, %v350
    %v352 = vrot.slane %v347, %v351
    %v354 = vmul.f32 %v346, %v352
    %vm355 = vcmask 31744
    %v356 = vsel %vm355, %v354, 0.0
    %357 = vadd.xlane.f32.xlu0 %v356
    %v358 = vpop.xlane.xlu0 %357
    %v359 = vmul.f32 %v358, 0.5
    %v360 = vsub.f32 %v341, %v359
    %v361 = vlaneseq
    %v362 = vand.u32 %v361, 127
    %vm363 = vcmp.eq.s32.totalorder %v362, 5
    %365 = vset.pattern.permute.xlu0 5
    %366 = vperm.xlu0 %365, %v360
    %v367 = vpop.permute.xlu0 %366
    %v369 = vsel %vm363, %v367, %v341
    %370 = vst [vmem:[#allocation8] sm:$0xff] %v369
    // Predicated region
    $region50: #{tpu_custom_call.1} parent=1 // pred_check
      _
    $region51: #{tpu_custom_call.1} parent=1 // pred_check_branch
      %372 = sbr.rel (0) target = $region53
    $region52: #{tpu_custom_call.1} parent=1 // pred_region
      %s374 = ssub.s32 128, 128
      %375 = vsyncadd [#allocation4], %s374
      %s377 = sshll.u32 [#allocation8], 4
      %s378 = int_to_ptr.vmem [resolvable:$true] %s377
      %380 = dma.vmem_to_hbm [thread:$0]  %s378, 128, %s9, [#allocation4]
    $region53: #{tpu_custom_call.1} parent=1 // pred_fallthru
      _
    // Predicated region
    $region54: #{tpu_custom_call.1} parent=1 // pred_check
      _
    $region55: #{tpu_custom_call.1} parent=1 // pred_check_branch
      %382 = sbr.rel (0) target = $region57
    $region56: #{tpu_custom_call.1} parent=1 // pred_region
      %383 = dma.done [#allocation4], 128
    $region57: #{tpu_custom_call.1} parent=1 // pred_fallthru
      _
    %384 = vsyncpa [#allocation3], 1
    %385 = vsyncpa [#allocation6], 1
    %386 = vsyncpa [#allocation4], 1

</llo_original>
